<compile_context>
chip_gen: v5e
topology: v5e:2x2
jax: 0.10.0
libtpu: 0.0.40
codegen_flags: <defaults>
</compile_context>

<pallas_src>
import functools

import jax
import jax.numpy as jnp
from jax import lax
from jax.experimental import pallas as pl
from jax.experimental.pallas import tpu as pltpu


def _round_up(v, m):
    return (v + m - 1) // m * m


def _global_avg_pool_kernel(x_ref, o_ref, acc_ref, *, inv_hw, hw, tile_hw):
    """x_ref: (TILE_N, TILE_C, TILE_HW); o_ref/acc_ref: (TILE_N, TILE_C)."""
    k = pl.program_id(2)

    @pl.when(k == 0)
    def _():
        acc_ref[...] = jnp.zeros_like(acc_ref)

    x = x_ref[...].astype(jnp.float32)
    if hw % tile_hw != 0:
        # Mask the (partial) last HW tile so out-of-range padding does not
        # pollute the reduction. Static no-op when tile_hw divides HW.
        lane = lax.broadcasted_iota(jnp.int32, x.shape, dimension=x.ndim - 1)
        x = jnp.where(lane < (hw - k * tile_hw), x, 0.0)

    acc_ref[...] += jnp.sum(x, axis=-1)

    @pl.when(k == pl.num_programs(2) - 1)
    def _():
        o_ref[...] = (acc_ref[...] * inv_hw).astype(o_ref.dtype)


def _default_target_block_bytes():
    # Bigger blocks on v7x amortize the ~0.35us/step overhead against its
    # ~3.2 TB/s HBM; 2 MiB already reaches ~85% of roofline on v5e/v6e.
    try:
        kind = jax.devices()[0].device_kind.lower()
    except Exception:
        kind = ""
    return (6 if "v7" in kind else 2) * 1024 * 1024


def _choose_tiles(n, c, hw, itemsize, target_bytes):
    """Pick (tile_n, tile_c, tile_hw) so the *padded* input block fits target."""
    pack = max(8, 32 // max(1, itemsize))  # sublane pack: 8 f32, 16 bf16, 32 i8

    def blk_bytes(tn, tc, thw):
        return tn * _round_up(tc, pack) * _round_up(thw, 128) * itemsize

    tile_n, tile_c, tile_hw = n, c, hw

    if blk_bytes(n, c, hw) > target_bytes:
        # 1) Shrink N (pack multiples; floor is pack, or full N when N < pack).
        min_tile_n = n if n <= pack else pack
        rows = target_bytes // blk_bytes(1, c, hw)
        if rows >= pack:
            tile_n = min(n, (rows // pack) * pack)
        else:
            tile_n = min_tile_n

        # 2) Shrink HW (multiples of 128, >= 512 elements for efficient DMA).
        if blk_bytes(tile_n, tile_c, tile_hw) > target_bytes:
            lanes = target_bytes // (tile_n * _round_up(c, pack) * itemsize)
            tile_hw = max((lanes // 128) * 128, min(_round_up(hw, 128), 512))
            if tile_hw >= hw:
                tile_hw = hw

        # 3) Still over budget (very large C): shrink C (multiples of 128).
        if blk_bytes(tile_n, tile_c, tile_hw) > target_bytes and c > 128:
            ch = target_bytes // (tile_n * _round_up(tile_hw, 128) * itemsize)
            tile_c = max(128, (ch // 128) * 128)
            if tile_c >= c:
                tile_c = c

    # 4) Small-batch parallelism: with a single N tile, split C so both v7x
    #    TensorCores get independent "parallel" tiles.
    if pl.cdiv(n, tile_n) == 1 and tile_c == c and c >= 256:
        half = _round_up((c + 1) // 2, 128)
        if half < c:
            tile_c = half

    return tile_n, tile_c, tile_hw


def global_avg_pool2d(x, *, target_block_bytes=None):
    """Pallas TPU implementation of GlobalAvgPool2d.forward.

    x: (N, C, H, W) -> (N, C, 1, 1), same dtype (accumulation in f32).
    """
    n, c, h, w = x.shape
    hw = h * w
    if target_block_bytes is None:
        target_block_bytes = _default_target_block_bytes()

    # Metadata-only reshape for row-major NCHW: H*W becomes the lane axis.
    x2 = x.reshape(n, c, hw)

    itemsize = jnp.dtype(x.dtype).itemsize
    tile_n, tile_c, tile_hw = _choose_tiles(n, c, hw, itemsize, target_block_bytes)
    grid = (pl.cdiv(n, tile_n), pl.cdiv(c, tile_c), pl.cdiv(hw, tile_hw))

    # Scoped-VMEM budget from the *padded* footprint (double-buffered input).
    pack = max(8, 32 // max(1, itemsize))
    in_blk = tile_n * _round_up(tile_c, pack) * _round_up(tile_hw, 128) * itemsize
    out_blk = _round_up(tile_n, 8) * _round_up(tile_c, 128) * itemsize
    acc_blk = _round_up(tile_n, 8) * _round_up(tile_c, 128) * 4
    needed = 2 * in_blk + 2 * out_blk + acc_blk + (4 << 20)
    vmem_limit = int(min(48 << 20, max(needed, 32 << 20)))

    cost = pl.CostEstimate(
        flops=n * c * hw + n * c,
        transcendentals=0,
        bytes_accessed=n * c * hw * itemsize + n * c * itemsize,
    )

    kernel = functools.partial(
        _global_avg_pool_kernel, inv_hw=1.0 / float(hw), hw=hw, tile_hw=tile_hw
    )

    out2 = pl.pallas_call(
        kernel,
        out_shape=jax.ShapeDtypeStruct((n, c), x.dtype),
        grid_spec=pltpu.PrefetchScalarGridSpec(
            num_scalar_prefetch=0,
            grid=grid,
            in_specs=[
                pl.BlockSpec((tile_n, tile_c, tile_hw), lambda i, j, k: (i, j, k)),
            ],
            out_specs=pl.BlockSpec((tile_n, tile_c), lambda i, j, k: (i, j)),
            scratch_shapes=[pltpu.VMEM((tile_n, tile_c), jnp.float32)],
        ),
        compiler_params=pltpu.CompilerParams(
            dimension_semantics=("parallel", "parallel", "arbitrary"),
            vmem_limit_bytes=vmem_limit,
        ),
        cost_estimate=cost,
    )(x2)

    # Free metadata reshape to match F.avg_pool2d output (N, C, 1, 1).
    return out2.reshape(n, c, 1, 1)


if __name__ == "__main__":
    key = jax.random.PRNGKey(0)
    # Small NCHW feature map consistent with the module's forward.
    x = jax.random.normal(key, (2, 4, 16, 16), dtype=jnp.float32)

    out = global_avg_pool2d(x)
    out = jax.block_until_ready(out)

    # Pure-JAX reference: global average pool (== F.avg_pool2d over full H, W).
    ref = jnp.mean(x, axis=(2, 3), keepdims=True)

    assert out.shape == ref.shape, (out.shape, ref.shape)
    assert out.dtype == ref.dtype, (out.dtype, ref.dtype)
    assert jnp.allclose(out, ref, rtol=1e-6, atol=1e-6), "avg-pool mismatch vs reference"

    print("KERNEL_OK")
</pallas_src>

<mosaic_0001>
module attributes {stable_mosaic.version = 11 : i64} {
  func.func @_global_avg_pool_kernel(%arg0: i32, %arg1: i32, %arg2: i32, %arg3: memref<2x4x256xf32, #tpu.memory_space<vmem>>, %arg4: memref<2x4xf32, #tpu.memory_space<vmem>>, %arg5: memref<2x4xf32, #tpu.memory_space<vmem>>) attributes {dimension_semantics = [#tpu.dimension_semantics<parallel>, #tpu.dimension_semantics<parallel>, #tpu.dimension_semantics<arbitrary>], iteration_bounds = array<i64: 1, 1, 1>, scalar_prefetch = 0 : i64, scratch_operands = 1 : i64, tpu.core_type = #tpu.core_type<tc>, window_params = [{transform_indices = @transform_0, window_bounds = array<i64: 2, 4, 256>}, {transform_indices = @transform_1, window_bounds = array<i64: 2, 4>}]} {
    %c0_i32 = arith.constant 0 : i32
    %0 = arith.cmpi eq, %arg2, %c0_i32 : i32
    %1 = arith.extui %0 : i1 to i32
    %c0_i32_0 = arith.constant 0 : i32
    %2 = arith.cmpi ne, %1, %c0_i32_0 : i32
    scf.if %2 {
      %cst_9 = arith.constant 0.000000e+00 : f32
      %11 = vector.broadcast %cst_9 : f32 to vector<2x4xf32>
      %c0_10 = arith.constant 0 : index
      %c0_11 = arith.constant 0 : index
      %12 = vector.load %arg5[%c0_10, %c0_11] : memref<2x4xf32, #tpu.memory_space<vmem>>, vector<2x4xf32>
      tpu.vector_store %arg5[%c0_10, %c0_11], %11 {strides = array<i32>} : memref<2x4xf32, #tpu.memory_space<vmem>>, vector<2x4xf32>,
    } else {
    }
    %c0 = arith.constant 0 : index
    %c0_1 = arith.constant 0 : index
    %c0_2 = arith.constant 0 : index
    %3 = vector.load %arg3[%c0, %c0_1, %c0_2] : memref<2x4x256xf32, #tpu.memory_space<vmem>>, vector<2x4x256xf32>
    %c0_3 = arith.constant 0 : index
    %c0_4 = arith.constant 0 : index
    %4 = vector.load %arg5[%c0_3, %c0_4] : memref<2x4xf32, #tpu.memory_space<vmem>>, vector<2x4xf32>
    %cst = arith.constant dense<0.000000e+00> : vector<2x4xf32>
    %5 = vector.multi_reduction <add>, %3, %cst [2] : vector<2x4x256xf32> to vector<2x4xf32>
    %6 = arith.addf %4, %5 : vector<2x4xf32>
    %c0_5 = arith.constant 0 : index
    %c0_6 = arith.constant 0 : index
    %7 = vector.load %arg5[%c0_5, %c0_6] : memref<2x4xf32, #tpu.memory_space<vmem>>, vector<2x4xf32>
    tpu.vector_store %arg5[%c0_5, %c0_6], %6 {strides = array<i32>} : memref<2x4xf32, #tpu.memory_space<vmem>>, vector<2x4xf32>,
    %c0_i32_7 = arith.constant 0 : i32
    %8 = arith.cmpi eq, %arg2, %c0_i32_7 : i32
    %9 = arith.extui %8 : i1 to i32
    %c0_i32_8 = arith.constant 0 : i32
    %10 = arith.cmpi ne, %9, %c0_i32_8 : i32
    scf.if %10 {
      %c0_9 = arith.constant 0 : index
      %c0_10 = arith.constant 0 : index
      %11 = vector.load %arg5[%c0_9, %c0_10] : memref<2x4xf32, #tpu.memory_space<vmem>>, vector<2x4xf32>
      %cst_11 = arith.constant 3.906250e-03 : f32
      %12 = vector.broadcast %cst_11 : f32 to vector<2x4xf32>
      %13 = arith.mulf %11, %12 : vector<2x4xf32>
      %c0_12 = arith.constant 0 : index
      %c0_13 = arith.constant 0 : index
      %14 = vector.load %arg4[%c0_12, %c0_13] : memref<2x4xf32, #tpu.memory_space<vmem>>, vector<2x4xf32>
      tpu.vector_store %arg4[%c0_12, %c0_13], %13 {strides = array<i32>} : memref<2x4xf32, #tpu.memory_space<vmem>>, vector<2x4xf32>,
    } else {
    }
    return
  }
  func.func @transform_0(%arg0: i32, %arg1: i32, %arg2: i32) -> (i32, i32, i32) {
    %c0_i32 = arith.constant 0 : i32
    return %arg0, %arg1, %arg2 : i32, i32, i32
  }
  func.func @transform_1(%arg0: i32, %arg1: i32, %arg2: i32) -> (i32, i32) {
    %c0_i32 = arith.constant 0 : i32
    return %arg0, %arg1 : i32, i32
  }
}

</mosaic_0001>

<llo_original>
// kernel: tpu_custom_call.1
$region0: #{tpu_custom_call.1}
  #allocation0 [shape = 'u32[]', space=smem, size = 0x4, offset = 0x4, fixed_abs, tag = 'smem constant byte address 0x4 - core index']
  #allocation1 [shape = 'u32[72,128]{1,0:T(1,128)}', space=vmem, size = 0x9000, scoped, tag = 'internal scratch']
  #allocation2 [shape = 'f32[2,4]{1,0:T(2,128)}', space=vmem, size = 0x400, scoped, tag = 'scratch operand']
  %s0 = inlined_call_operand.hbm [shape: f32[2,4,256], index: 0, kind: input, shape index: {}]
  %s1 = inlined_call_operand.hbm [shape: f32[2,4], index: 1, kind: output, shape index: {}]
  %s2 = sld [smem:[#allocation0]]
  $region26: #{tpu_custom_call.1} parent=0
    _
  %s4 = ssub.s32 1, %s2
  %s5 = scalar_select 0, %s4, %s2
  $region1: #{tpu_custom_call.1} parent=0
    #allocation3 [shape = 'u8[8192]{0}', space=vmem, size = 0x2000, scoped, tag = 'input window, operand 0, single buffered']
    #allocation4 [shape = 's32[1]{0}', space=sflag, size = 0x4, scoped, tag = 'scoped memory for tpu_custom_call.1']
    #allocation5 [shape = 's32[1]{0}', space=sflag, size = 0x4, scoped, tag = 'scoped memory for tpu_custom_call.1']
    #allocation6 [shape = 'u8[1024]{0}', space=vmem, size = 0x400, scoped, tag = 'output window, operand 0, single buffered']
    %6 = vsyncpa [#allocation4], 0
    %7 = vsyncpa [#allocation5], 0
    // Predicated region
    $region2: #{tpu_custom_call.1} parent=1 // pred_check
      _
    $region3: #{tpu_custom_call.1} parent=1 // pred_check_branch
      %9 = sbr.rel (0) target = $region5
    $region4: #{tpu_custom_call.1} parent=1 // pred_region
      %11 = vsyncadd [#allocation4], 0
      %s12 = sshll.u32 %s0, 4
      %s13 = int_to_ptr.hbm [resolvable:$true] %s12
      %s14 = sshll.u32 [#allocation3], 4
      %s15 = int_to_ptr.vmem [resolvable:$true] %s14
      %20 = dma.hbm_to_vmem [thread:$0]  %s13, 256, %s15, [#allocation4], 128, 128, 8
    $region5: #{tpu_custom_call.1} parent=1 // pred_fallthru
      _
    // Predicated region
    $region6: #{tpu_custom_call.1} parent=1 // pred_check
      _
    $region7: #{tpu_custom_call.1} parent=1 // pred_check_branch
      %22 = sbr.rel (0) target = $region9
    $region8: #{tpu_custom_call.1} parent=1 // pred_region
      %24 = dma.done [#allocation4], 256
    $region9: #{tpu_custom_call.1} parent=1 // pred_fallthru
      _
    %p25 = scmp.eq.s32.totalorder 0, 0
    // Predicated region
    $region10: #{tpu_custom_call.1} parent=1 // pred_check
      %p26 = pneg %p25
    $region11: #{tpu_custom_call.1} parent=1 // pred_check_branch
      %28 = sbr.rel (%p26) target = $region13
    $region12: #{tpu_custom_call.1} parent=1 // pred_region
      %vm29 = vcmask 25600
      %30 = vst.msk [vmem:[#allocation2] sm:$0x3] %vm29, 0.0
    $region13: #{tpu_custom_call.1} parent=1 // pred_fallthru
      _
    %v31 = vld [vmem:[#allocation3] sm:$0xff]
    %v32 = vld [vmem:[#allocation3 + $0x8] sm:$0xff]
    %v33 = vld [vmem:[#allocation2] sm:$0x3]
    %36 = vst [vmem:[#allocation1] ss:$2 sm:$0xff] %v31
    %v37 = vld.sshfl [vmem:[#allocation1] sm:$0xff pattern:$0x75316420]
    %v38 = vld.sshfl [vmem:[#allocation1 + $0x8] sm:$0xff pattern:$0x75316420]
    %s39 = scalar_lea.vmem [#allocation1], 16
    %40 = vst [vmem:[%s39] ss:$2 sm:$0xff] %v32
    %v41 = vld.sshfl [vmem:[#allocation1 + $0x10] sm:$0xff pattern:$0x75316420]
    %v42 = vld.sshfl [vmem:[#allocation1 + $0x18] sm:$0xff pattern:$0x75316420]
    %vm47 = vcmask 1043456
    %v48 = vsel %vm47, %v37, 0.0
    %v49 = vsel %vm47, %v38, 0.0
    %v50 = vadd.f32 %v48, %v49
    %51 = vadd.xlane.f32.xlu0 %v50
    %v52 = vpop.xlane.xlu0 %51
    %v53 = vsel %vm47, %v41, 0.0
    %v54 = vsel %vm47, %v42, 0.0
    %v55 = vadd.f32 %v53, %v54
    %56 = vadd.xlane.f32.xlu0 %v55
    %v57 = vpop.xlane.xlu0 %56
    %v60 = vlaneseq
    %v61 = vand.u32 %v60, 127
    %v62 = vperm.slane %v52, %v61
    %v63 = vperm.slane %v57, %v61
    %vm64 = vcmask 1041409
    %v65 = vsel %vm64, %v63, %v62
    %v67 = vadd.f32 %v33, %v65
    %vm68 = vcmask 25600
    %69 = vst.msk [vmem:[#allocation2] sm:$0x3] %vm68, %v67
    // Predicated region
    $region14: #{tpu_custom_call.1} parent=1 // pred_check
      %p70 = pneg %p25
    $region15: #{tpu_custom_call.1} parent=1 // pred_check_branch
      %72 = sbr.rel (%p70) target = $region17
    $region16: #{tpu_custom_call.1} parent=1 // pred_region
      %v73 = vld [vmem:[#allocation2] sm:$0x3]
      %v74 = vmul.f32 %v73, 0.00390625
      %75 = vst.msk [vmem:[#allocation6] sm:$0x3] %vm68, %v74
    $region17: #{tpu_custom_call.1} parent=1 // pred_fallthru
      _
    // Predicated region
    $region18: #{tpu_custom_call.1} parent=1 // pred_check
      _
    $region19: #{tpu_custom_call.1} parent=1 // pred_check_branch
      %77 = sbr.rel (0) target = $region21
    $region20: #{tpu_custom_call.1} parent=1 // pred_region
      %79 = vsyncadd [#allocation5], 0
      %s81 = sshll.u32 [#allocation6], 4
      %s82 = int_to_ptr.vmem [resolvable:$true] %s81
      %s83 = sshll.u32 %s1, 4
      %s84 = int_to_ptr.hbm [resolvable:$true] %s83
      %86 = dma.vmem_to_hbm [thread:$0]  %s82, 32, %s84, [#allocation5]
    $region21: #{tpu_custom_call.1} parent=1 // pred_fallthru
      _
    // Predicated region
    $region22: #{tpu_custom_call.1} parent=1 // pred_check
      _
    $region23: #{tpu_custom_call.1} parent=1 // pred_check_branch
      %88 = sbr.rel (0) target = $region25
    $region24: #{tpu_custom_call.1} parent=1 // pred_region
      %90 = dma.done [#allocation5], 32
    $region25: #{tpu_custom_call.1} parent=1 // pred_fallthru
      _
    %91 = vsyncpa [#allocation4], 1
    %92 = vsyncpa [#allocation5], 1

</llo_original>
